<compile_context>
chip_gen: v6e
topology: v6e:2x2x1
jax: 0.10.0
libtpu: 0.0.40
codegen_flags: <defaults>
</compile_context>

<pallas_src>
import functools
import math

import jax
import jax.numpy as jnp
from jax.experimental import pallas as pl
from jax.experimental.pallas import tpu as pltpu

_LANE = 128      # lane granule (last dim)
_SUBLANE = 8     # f32 sublane granule (second-to-last dim)
_K0_ALIGN = 16   # first-layer contraction pad (bf16 sublane granule)


def _round_up(x, m):
    return ((x + m - 1) // m) * m


def _mlp_fused_kernel(*refs, activations, out_widths):
    """Whole MLP in one kernel: L x (bf16 MXU matmul, f32 accum, bias, act)."""
    n = len(activations)
    x_ref = refs[0]
    w_refs = refs[1:1 + n]              # bf16 [Kp, Np] (pre-transposed)
    b_refs = refs[1 + n:1 + 2 * n]      # f32  [1, Np]
    o_ref = refs[1 + 2 * n]             # f32  [tb, Np_last]
    h_ref = refs[1 + 2 * n + 1]         # f32 VMEM scratch [tb, max_Np]

    h = x_ref[...]                                        # f32 [tb, K0p]
    for li, (w_ref, b_ref, act) in enumerate(zip(w_refs, b_refs, activations)):
        y = jnp.dot(h.astype(jnp.bfloat16), w_ref[...],   # bf16 MXU, f32 accum
                    preferred_element_type=jnp.float32)
        y = y + b_ref[...]                                 # broadcast bias
        if act == "relu":
            y = jnp.maximum(y, 0.0)      # VPU
        elif act == "tanh":
            y = jnp.tanh(y)              # EUP
        elif act == "sigmoid":
            y = jax.nn.sigmoid(y)        # EUP
        # any other string -> identity (matches the PyTorch module)
        if li + 1 < n:
            w_out = out_widths[li]
            h_ref[:, :w_out] = y         # stage in VMEM: bounds vreg pressure
            h = h_ref[:, :w_out]
        else:
            o_ref[...] = y.astype(o_ref.dtype)


def init_mlp_params(layers_option, key):
    """PyTorch-style params: W [out, in], b [out], mirroring nn.Linear init."""
    params = []
    for (in_f, out_f, use_bias, act) in layers_option:
        key, kw, kb = jax.random.split(key, 3)
        bound = 1.0 / math.sqrt(in_f)
        w = jax.random.uniform(kw, (out_f, in_f), jnp.float32, -bound, bound)
        if use_bias:
            b = jax.random.uniform(kb, (out_f,), jnp.float32, -bound, bound)
        else:
            b = jnp.zeros((out_f,), jnp.float32)  # bias=False -> add zeros
        params.append((w, b, act.lower()))
    return params


def prepare_params(params):
    """One-time: W -> bf16 [in, out]; pad N to 128 lanes, first K to 16 only."""
    ws, bs, acts = [], [], []
    prev_np = None
    for li, (w, b, act) in enumerate(params):
        out_f, in_f = w.shape
        if li == 0:
            kp = _round_up(in_f, _K0_ALIGN)   # no 128-pad of K0: 4x less W0 DMA
        else:
            kp = prev_np                      # must equal prev layer's padded N
        np_ = _round_up(out_f, _LANE)
        w_t = jnp.zeros((kp, np_), jnp.float32).at[:in_f, :out_f].set(w.T)
        ws.append(w_t.astype(jnp.bfloat16))   # bf16 once: native MXU operands
        bs.append(jnp.zeros((1, np_), jnp.float32).at[0, :out_f].set(b))
        acts.append(act)
        prev_np = np_
    return {
        "ws": ws, "bs": bs, "acts": tuple(acts),
        "in_features": params[0][0].shape[1],
        "out_features": params[-1][0].shape[0],
    }


def mlp_forward(x, prepared):
    """Single fused pallas_call for the whole MLP (batch-tiled grid)."""
    ws, bs, acts = prepared["ws"], prepared["bs"], prepared["acts"]
    in_f, out_f = prepared["in_features"], prepared["out_features"]
    batch = x.shape[0]

    k0p = ws[0].shape[0]
    np_last = ws[-1].shape[1]
    out_widths = tuple(w.shape[1] for w in ws)
    max_np = max(out_widths)

    # Batch tile: fill MXU rows at scale (cap 256), never exceed padded batch.
    bp8 = _round_up(batch, _SUBLANE)
    tb = min(bp8, 256)
    num_tiles = -(-bp8 // tb)
    bp = num_tiles * tb

    # No wrapper-side copy when the input is already aligned.
    if bp != batch or k0p != in_f:
        x_in = jnp.pad(x, ((0, bp - batch), (0, k0p - in_f)))
    else:
        x_in = x

    # Generation-aware VMEM budget: resident bf16 weights + f32 biases +
    # double-buffered x/out tiles + staged activation, with 2x headroom,
    # clamped under v7x's 64 MiB physical VMEM.
    resident = (sum(w.size * 2 for w in ws) + sum(b.size * 4 for b in bs)
                + 2 * tb * k0p * 4 + 2 * tb * np_last * 4 + tb * max_np * 4)
    vmem_limit = int(min(56 * 1024 * 1024, max(4 * 1024 * 1024, 2 * resident)))
    # TODO(synk): if resident weights alone outgrow the VMEM limit, add a
    # per-layer K grid axis (last, "arbitrary") with an f32 VMEM accumulator
    # instead of keeping every full weight resident.

    flops = 2 * bp * sum(w.shape[0] * w.shape[1] for w in ws)
    transcendentals = bp * sum(
        w.shape[1] for w, a in zip(ws, acts) if a in ("tanh", "sigmoid"))
    bytes_accessed = (x_in.size * 4 + sum(w.size * 2 for w in ws)
                      + sum(b.size * 4 for b in bs) + bp * np_last * 4)

    kernel = functools.partial(
        _mlp_fused_kernel, activations=acts, out_widths=out_widths)

    out_pad = pl.pallas_call(
        kernel,
        out_shape=jax.ShapeDtypeStruct((bp, np_last), jnp.float32),
        grid=(num_tiles,),
        in_specs=[pl.BlockSpec((tb, k0p), lambda i: (i, 0))]
                 + [pl.BlockSpec(w.shape, lambda i: (0, 0)) for w in ws]
                 + [pl.BlockSpec(b.shape, lambda i: (0, 0)) for b in bs],
        out_specs=pl.BlockSpec((tb, np_last), lambda i: (i, 0)),
        scratch_shapes=[pltpu.VMEM((tb, max_np), jnp.float32)],
        cost_estimate=pl.CostEstimate(
            flops=flops,
            transcendentals=transcendentals,
            bytes_accessed=bytes_accessed),
        compiler_params=pltpu.CompilerParams(
            dimension_semantics=("parallel",),
            vmem_limit_bytes=vmem_limit),
    )(x_in, *ws, *bs)

    return out_pad[:batch, :out_f]


def mlp_reference(x, params):
    """Pure-JAX f32 reference (same math as nn.Linear + activations)."""
    h = x
    for (w, b, act) in params:
        h = h @ w.T + b
        if act == "relu":
            h = jnp.maximum(h, 0.0)
        elif act == "tanh":
            h = jnp.tanh(h)
        elif act == "sigmoid":
            h = jax.nn.sigmoid(h)
    return h


if __name__ == "__main__":
    # layers_option entries: (in_features, out_features, bias, activation)
    layers_option = [
        (32, 64, True, "relu"),
        (64, 64, True, "tanh"),
        (64, 16, False, "none"),   # final layer: Linear only (no activation)
    ]

    key = jax.random.PRNGKey(0)
    key, kx = jax.random.split(key)
    batch = 8
    x = jax.random.normal(kx, (batch, layers_option[0][0]), jnp.float32)

    params = init_mlp_params(layers_option, key)
    prepared = prepare_params(params)

    out = mlp_forward(x, prepared)
    jax.block_until_ready(out)

    ref = mlp_reference(x, params)
    assert out.shape == (batch, layers_option[-1][1])
    # bf16 MXU inputs (f32 accumulate): loosened tolerance vs f32 nn.Linear math.
    assert jnp.allclose(out, ref, atol=5e-2, rtol=5e-2), (
        float(jnp.max(jnp.abs(out - ref))))
    print("KERNEL_OK")
</pallas_src>

<mosaic_0001>
module attributes {stable_mosaic.version = 11 : i64} {
  func.func @_mlp_fused_kernel(%arg0: i32, %arg1: memref<8x32xf32, #tpu.memory_space<vmem>>, %arg2: memref<32x128xbf16, #tpu.memory_space<vmem>>, %arg3: memref<128x128xbf16, #tpu.memory_space<vmem>>, %arg4: memref<128x128xbf16, #tpu.memory_space<vmem>>, %arg5: memref<1x128xf32, #tpu.memory_space<vmem>>, %arg6: memref<1x128xf32, #tpu.memory_space<vmem>>, %arg7: memref<1x128xf32, #tpu.memory_space<vmem>>, %arg8: memref<8x128xf32, #tpu.memory_space<vmem>>, %arg9: memref<8x128xf32, #tpu.memory_space<vmem>>) attributes {dimension_semantics = [#tpu.dimension_semantics<parallel>], iteration_bounds = array<i64: 1>, scalar_prefetch = 0 : i64, scratch_operands = 1 : i64, tpu.core_type = #tpu.core_type<tc>, window_params = [{transform_indices = @transform_0, window_bounds = array<i64: 8, 32>}, {pipeline_mode = #tpu.pipeline_mode<synchronous>, transform_indices = @transform_1, window_bounds = array<i64: 32, 128>}, {pipeline_mode = #tpu.pipeline_mode<synchronous>, transform_indices = @transform_2, window_bounds = array<i64: 128, 128>}, {pipeline_mode = #tpu.pipeline_mode<synchronous>, transform_indices = @transform_3, window_bounds = array<i64: 128, 128>}, {pipeline_mode = #tpu.pipeline_mode<synchronous>, transform_indices = @transform_4, window_bounds = array<i64: 1, 128>}, {pipeline_mode = #tpu.pipeline_mode<synchronous>, transform_indices = @transform_5, window_bounds = array<i64: 1, 128>}, {pipeline_mode = #tpu.pipeline_mode<synchronous>, transform_indices = @transform_6, window_bounds = array<i64: 1, 128>}, {transform_indices = @transform_7, window_bounds = array<i64: 8, 128>}]} {
    %c0 = arith.constant 0 : index
    %c0_0 = arith.constant 0 : index
    %0 = vector.load %arg1[%c0, %c0_0] : memref<8x32xf32, #tpu.memory_space<vmem>>, vector<8x32xf32>
    %1 = arith.truncf %0 : vector<8x32xf32> to vector<8x32xbf16>
    %c0_1 = arith.constant 0 : index
    %c0_2 = arith.constant 0 : index
    %2 = vector.load %arg2[%c0_1, %c0_2] : memref<32x128xbf16, #tpu.memory_space<vmem>>, vector<32x128xbf16>
    %cst = arith.constant dense<0.000000e+00> : vector<8x128xf32>
    %3 = tpu.matmul %1, %2, %cst {dimension_numbers = #tpu.dot_dimension_numbers<[1], [0], [0], [1], [0, 0, 1, 1], [], []>} : vector<8x32xbf16>, vector<32x128xbf16>, vector<8x128xf32> -> vector<8x128xf32>
    %c0_3 = arith.constant 0 : index
    %c0_4 = arith.constant 0 : index
    %4 = vector.load %arg5[%c0_3, %c0_4] : memref<1x128xf32, #tpu.memory_space<vmem>>, vector<1x128xf32>
    %5 = vector.broadcast %4 : vector<1x128xf32> to vector<8x128xf32>
    %6 = arith.addf %3, %5 : vector<8x128xf32>
    %cst_5 = arith.constant 0.000000e+00 : f32
    %7 = vector.broadcast %cst_5 : f32 to vector<8x128xf32>
    %8 = arith.maximumf %6, %7 : vector<8x128xf32>
    %c0_6 = arith.constant 0 : index
    %c0_7 = arith.constant 0 : index
    %9 = vector.load %arg9[%c0_6, %c0_7] : memref<8x128xf32, #tpu.memory_space<vmem>>, vector<8x128xf32>
    tpu.vector_store %arg9[%c0_6, %c0_7], %8 {strides = array<i32>} : memref<8x128xf32, #tpu.memory_space<vmem>>, vector<8x128xf32>,
    %c0_8 = arith.constant 0 : index
    %c0_9 = arith.constant 0 : index
    %10 = vector.load %arg9[%c0_8, %c0_9] : memref<8x128xf32, #tpu.memory_space<vmem>>, vector<8x128xf32>
    %11 = arith.truncf %10 : vector<8x128xf32> to vector<8x128xbf16>
    %c0_10 = arith.constant 0 : index
    %c0_11 = arith.constant 0 : index
    %12 = vector.load %arg3[%c0_10, %c0_11] : memref<128x128xbf16, #tpu.memory_space<vmem>>, vector<128x128xbf16>
    %cst_12 = arith.constant dense<0.000000e+00> : vector<8x128xf32>
    %13 = tpu.matmul %11, %12, %cst_12 {dimension_numbers = #tpu.dot_dimension_numbers<[1], [0], [0], [1], [0, 0, 1, 1], [], []>} : vector<8x128xbf16>, vector<128x128xbf16>, vector<8x128xf32> -> vector<8x128xf32>
    %c0_13 = arith.constant 0 : index
    %c0_14 = arith.constant 0 : index
    %14 = vector.load %arg6[%c0_13, %c0_14] : memref<1x128xf32, #tpu.memory_space<vmem>>, vector<1x128xf32>
    %15 = vector.broadcast %14 : vector<1x128xf32> to vector<8x128xf32>
    %16 = arith.addf %13, %15 : vector<8x128xf32>
    %17 = math.tanh %16 : vector<8x128xf32>
    %c0_15 = arith.constant 0 : index
    %c0_16 = arith.constant 0 : index
    %18 = vector.load %arg9[%c0_15, %c0_16] : memref<8x128xf32, #tpu.memory_space<vmem>>, vector<8x128xf32>
    tpu.vector_store %arg9[%c0_15, %c0_16], %17 {strides = array<i32>} : memref<8x128xf32, #tpu.memory_space<vmem>>, vector<8x128xf32>,
    %c0_17 = arith.constant 0 : index
    %c0_18 = arith.constant 0 : index
    %19 = vector.load %arg9[%c0_17, %c0_18] : memref<8x128xf32, #tpu.memory_space<vmem>>, vector<8x128xf32>
    %20 = arith.truncf %19 : vector<8x128xf32> to vector<8x128xbf16>
    %c0_19 = arith.constant 0 : index
    %c0_20 = arith.constant 0 : index
    %21 = vector.load %arg4[%c0_19, %c0_20] : memref<128x128xbf16, #tpu.memory_space<vmem>>, vector<128x128xbf16>
    %cst_21 = arith.constant dense<0.000000e+00> : vector<8x128xf32>
    %22 = tpu.matmul %20, %21, %cst_21 {dimension_numbers = #tpu.dot_dimension_numbers<[1], [0], [0], [1], [0, 0, 1, 1], [], []>} : vector<8x128xbf16>, vector<128x128xbf16>, vector<8x128xf32> -> vector<8x128xf32>
    %c0_22 = arith.constant 0 : index
    %c0_23 = arith.constant 0 : index
    %23 = vector.load %arg7[%c0_22, %c0_23] : memref<1x128xf32, #tpu.memory_space<vmem>>, vector<1x128xf32>
    %24 = vector.broadcast %23 : vector<1x128xf32> to vector<8x128xf32>
    %25 = arith.addf %22, %24 : vector<8x128xf32>
    %c0_24 = arith.constant 0 : index
    %c0_25 = arith.constant 0 : index
    %26 = vector.load %arg8[%c0_24, %c0_25] : memref<8x128xf32, #tpu.memory_space<vmem>>, vector<8x128xf32>
    tpu.vector_store %arg8[%c0_24, %c0_25], %25 {strides = array<i32>} : memref<8x128xf32, #tpu.memory_space<vmem>>, vector<8x128xf32>,
    return
  }
  func.func @transform_0(%arg0: i32) -> (i32, i32) {
    %c0_i32 = arith.constant 0 : i32
    %c0_i32_0 = arith.constant 0 : i32
    return %arg0, %c0_i32 : i32, i32
  }
  func.func @transform_1(%arg0: i32) -> (i32, i32) {
    %c0_i32 = arith.constant 0 : i32
    %c0_i32_0 = arith.constant 0 : i32
    %c0_i32_1 = arith.constant 0 : i32
    return %c0_i32, %c0_i32_0 : i32, i32
  }
  func.func @transform_2(%arg0: i32) -> (i32, i32) {
    %c0_i32 = arith.constant 0 : i32
    %c0_i32_0 = arith.constant 0 : i32
    %c0_i32_1 = arith.constant 0 : i32
    return %c0_i32, %c0_i32_0 : i32, i32
  }
  func.func @transform_3(%arg0: i32) -> (i32, i32) {
    %c0_i32 = arith.constant 0 : i32
    %c0_i32_0 = arith.constant 0 : i32
    %c0_i32_1 = arith.constant 0 : i32
    return %c0_i32, %c0_i32_0 : i32, i32
  }
  func.func @transform_4(%arg0: i32) -> (i32, i32) {
    %c0_i32 = arith.constant 0 : i32
    %c0_i32_0 = arith.constant 0 : i32
    %c0_i32_1 = arith.constant 0 : i32
    return %c0_i32, %c0_i32_0 : i32, i32
  }
  func.func @transform_5(%arg0: i32) -> (i32, i32) {
    %c0_i32 = arith.constant 0 : i32
    %c0_i32_0 = arith.constant 0 : i32
    %c0_i32_1 = arith.constant 0 : i32
    return %c0_i32, %c0_i32_0 : i32, i32
  }
  func.func @transform_6(%arg0: i32) -> (i32, i32) {
    %c0_i32 = arith.constant 0 : i32
    %c0_i32_0 = arith.constant 0 : i32
    %c0_i32_1 = arith.constant 0 : i32
    return %c0_i32, %c0_i32_0 : i32, i32
  }
  func.func @transform_7(%arg0: i32) -> (i32, i32) {
    %c0_i32 = arith.constant 0 : i32
    %c0_i32_0 = arith.constant 0 : i32
    return %arg0, %c0_i32 : i32, i32
  }
}

</mosaic_0001>

<llo_original>
// kernel: tpu_custom_call.1
$region0: #{tpu_custom_call.1}
  #allocation0 [shape = 'u32[]', space=smem, size = 0x4, offset = 0x4, fixed_abs, tag = 'smem constant byte address 0x4 - core index']
  #allocation1 [shape = 'u32[144,128]{1,0:T(1,128)}', space=vmem, size = 0x12000, scoped, tag = 'internal scratch']
  #allocation2 [shape = 'f32[8,128]{1,0:T(8,128)}', space=vmem, size = 0x1000, scoped, tag = 'scratch operand']
  %s0 = inlined_call_operand.hbm [shape: f32[8,32], index: 0, kind: input, shape index: {}]
  %s1 = inlined_call_operand.hbm [shape: bf16[32,128], index: 1, kind: input, shape index: {}]
  %s2 = inlined_call_operand.hbm [shape: bf16[128,128], index: 2, kind: input, shape index: {}]
  %s3 = inlined_call_operand.hbm [shape: bf16[128,128], index: 3, kind: input, shape index: {}]
  %s4 = inlined_call_operand.vmem [shape: f32[1,128], index: 4, kind: input, shape index: {}]
  %s5 = inlined_call_operand.vmem [shape: f32[1,128], index: 5, kind: input, shape index: {}]
  %s6 = inlined_call_operand.vmem [shape: f32[1,128], index: 6, kind: input, shape index: {}]
  %s7 = inlined_call_operand.hbm [shape: f32[8,128], index: 7, kind: output, shape index: {}]
  %s8 = sld [smem:[#allocation0]]
  $region54: #{tpu_custom_call.1} parent=0
    _
  %s10 = ssub.s32 1, %s8
  %s11 = scalar_select 0, %s10, %s8
  $region1: #{tpu_custom_call.1} parent=0
    #allocation3 [shape = 'u8[4096]{0}', space=vmem, size = 0x1000, scoped, tag = 'input window, operand 0, single buffered']
    #allocation4 [shape = 's32[1]{0}', space=sflag, size = 0x4, scoped, tag = 'scoped memory for tpu_custom_call.1']
    #allocation5 [shape = 's32[1]{0}', space=sflag, size = 0x4, scoped, tag = 'scoped memory for tpu_custom_call.1']
    #allocation6 [shape = 'u8[8192]{0}', space=vmem, size = 0x2000, scoped, tag = 'input window, operand 1, single buffered']
    #allocation7 [shape = 's32[1]{0}', space=sflag, size = 0x4, scoped, tag = 'scoped memory for tpu_custom_call.1']
    #allocation8 [shape = 'u8[32768]{0}', space=vmem, size = 0x8000, scoped, tag = 'input window, operand 2, single buffered']
    #allocation9 [shape = 'u8[32768]{0}', space=vmem, size = 0x8000, scoped, tag = 'input window, operand 3, single buffered']
    #allocation10 [shape = 's32[1]{0}', space=sflag, size = 0x4, scoped, tag = 'scoped memory for tpu_custom_call.1']
    #allocation11 [shape = 'u8[4096]{0}', space=vmem, size = 0x1000, scoped, tag = 'output window, operand 0, single buffered']
    %12 = vsyncpa [#allocation4], 0
    %13 = vsyncpa [#allocation7], 0
    %14 = vsyncpa [#allocation10], 0
    %15 = vsyncpa [#allocation5], 0
    // Predicated region
    $region2: #{tpu_custom_call.1} parent=1 // pred_check
      _
    $region3: #{tpu_custom_call.1} parent=1 // pred_check_branch
      %17 = sbr.rel (0) target = $region5
    $region4: #{tpu_custom_call.1} parent=1 // pred_region
      %s19 = ssub.s32 128, 128
      %20 = vsyncadd [#allocation4], %s19
      %s22 = sshll.u32 [#allocation3], 4
      %s23 = int_to_ptr.vmem [resolvable:$true] %s22
      %25 = dma.hbm_to_vmem [thread:$0]  %s0, 128, %s23, [#allocation4]
    $region5: #{tpu_custom_call.1} parent=1 // pred_fallthru
      _
    // Predicated region
    $region6: #{tpu_custom_call.1} parent=1 // pred_check
      _
    $region7: #{tpu_custom_call.1} parent=1 // pred_check_branch
      %27 = sbr.rel (0) target = $region9
    $region8: #{tpu_custom_call.1} parent=1 // pred_region
      %s29 = ssub.s32 256, 256
      %30 = vsyncadd [#allocation7], %s29
      %s31 = sshll.u32 [#allocation6], 4
      %s32 = int_to_ptr.vmem [resolvable:$true] %s31
      %37 = dma.hbm_to_vmem [thread:$0]  %s1, 256, %s32, [#allocation7], 64, 64, 4
    $region9: #{tpu_custom_call.1} parent=1 // pred_fallthru
      _
    // Predicated region
    $region10: #{tpu_custom_call.1} parent=1 // pred_check
      _
    $region11: #{tpu_custom_call.1} parent=1 // pred_check_branch
      %39 = sbr.rel (0) target = $region13
    $region12: #{tpu_custom_call.1} parent=1 // pred_region
      %s41 = ssub.s32 1024, 1024
      %42 = vsyncadd [#allocation7], %s41
      %s43 = sshll.u32 [#allocation8], 4
      %s44 = int_to_ptr.vmem [resolvable:$true] %s43
      %49 = dma.hbm_to_vmem [thread:$0]  %s2, 1024, %s44, [#allocation7], 64, 64, 4
    $region13: #{tpu_custom_call.1} parent=1 // pred_fallthru
      _
    // Predicated region
    $region14: #{tpu_custom_call.1} parent=1 // pred_check
      _
    $region15: #{tpu_custom_call.1} parent=1 // pred_check_branch
      %51 = sbr.rel (0) target = $region17
    $region16: #{tpu_custom_call.1} parent=1 // pred_region
      %s53 = ssub.s32 1024, 1024
      %54 = vsyncadd [#allocation10], %s53
      %s55 = sshll.u32 [#allocation9], 4
      %s56 = int_to_ptr.vmem [resolvable:$true] %s55
      %61 = dma.hbm_to_vmem [thread:$0]  %s3, 1024, %s56, [#allocation10], 64, 64, 4
    $region17: #{tpu_custom_call.1} parent=1 // pred_fallthru
      _
    // Predicated region
    $region18: #{tpu_custom_call.1} parent=1 // pred_check
      _
    $region19: #{tpu_custom_call.1} parent=1 // pred_check_branch
      %63 = sbr.rel (0) target = $region21
    $region20: #{tpu_custom_call.1} parent=1 // pred_region
      _
    $region21: #{tpu_custom_call.1} parent=1 // pred_fallthru
      _
    // Predicated region
    $region22: #{tpu_custom_call.1} parent=1 // pred_check
      _
    $region23: #{tpu_custom_call.1} parent=1 // pred_check_branch
      %65 = sbr.rel (0) target = $region25
    $region24: #{tpu_custom_call.1} parent=1 // pred_region
      _
    $region25: #{tpu_custom_call.1} parent=1 // pred_fallthru
      _
    // Predicated region
    $region26: #{tpu_custom_call.1} parent=1 // pred_check
      _
    $region27: #{tpu_custom_call.1} parent=1 // pred_check_branch
      %67 = sbr.rel (0) target = $region29
    $region28: #{tpu_custom_call.1} parent=1 // pred_region
      _
    $region29: #{tpu_custom_call.1} parent=1 // pred_fallthru
      _
    // Predicated region
    $region30: #{tpu_custom_call.1} parent=1 // pred_check
      _
    $region31: #{tpu_custom_call.1} parent=1 // pred_check_branch
      %69 = sbr.rel (0) target = $region33
    $region32: #{tpu_custom_call.1} parent=1 // pred_region
      %70 = dma.done [#allocation4], 128
    $region33: #{tpu_custom_call.1} parent=1 // pred_fallthru
      _
    // Predicated region
    $region34: #{tpu_custom_call.1} parent=1 // pred_check
      _
    $region35: #{tpu_custom_call.1} parent=1 // pred_check_branch
      %72 = sbr.rel (0) target = $region37
    $region36: #{tpu_custom_call.1} parent=1 // pred_region
      %73 = dma.done [#allocation7], 256
    $region37: #{tpu_custom_call.1} parent=1 // pred_fallthru
      _
    // Predicated region
    $region38: #{tpu_custom_call.1} parent=1 // pred_check
      _
    $region39: #{tpu_custom_call.1} parent=1 // pred_check_branch
      %75 = sbr.rel (0) target = $region41
    $region40: #{tpu_custom_call.1} parent=1 // pred_region
      %76 = dma.done [#allocation7], 1024
    $region41: #{tpu_custom_call.1} parent=1 // pred_fallthru
      _
    // Predicated region
    $region42: #{tpu_custom_call.1} parent=1 // pred_check
      _
    $region43: #{tpu_custom_call.1} parent=1 // pred_check_branch
      %78 = sbr.rel (0) target = $region45
    $region44: #{tpu_custom_call.1} parent=1 // pred_region
      %79 = dma.done [#allocation10], 1024
    $region45: #{tpu_custom_call.1} parent=1 // pred_fallthru
      _
    %v81 = vld [vmem:[#allocation3] sm:$0xff]
    %v82 = vpack.c.bf16 %v81, %v81
    %v83 = vld [vmem:[#allocation6] sm:$0xf]
    %v84 = vld [vmem:[#allocation6 + $0x4] sm:$0xf]
    %v85 = vld [vmem:[#allocation6 + $0x8] sm:$0xf]
    %v86 = vld [vmem:[#allocation6 + $0xc] sm:$0xf]
    %v87 = vld [vmem:[%s4] sm:$0x1]
    %v89 = vlaneseq
    %v90 = vshrl.u32 %v89, 7
    %v91 = vsub.s32 0, %v90
    %v92 = vrot.slane %v87, %v91
    %v98 = vunpack.c.l.b16 %v83
    %v99 = vunpack.c.l.b16 %v84
    %v100 = vunpack.c.l.b16 %v85
    %v101 = vunpack.c.l.b16 %v86
    %v102 = vpack.c.b16 %v99, %v98
    %v103 = vpack.c.b16 %v101, %v100
    %vm106 = vcmask 261120
    %v108 = vsel %vm106, %v82, 0
    %110 = vmatprep.subr.bf16.mxu0 0
    %111 = vmatpush1.bf16.msra.mxu0 0
    %112 = vmatprep.subr.bf16.mxu0 0
    %113 = vmatpush1.bf16.msra.mxu0 0
    %114 = vmatprep.subr.bf16.mxu0 0
    %115 = vmatpush1.bf16.msra.mxu0 0
    %116 = vmatprep.subr.bf16.mxu0 0
    %117 = vmatpush1.bf16.msra.mxu0 0
    %118 = vmatprep.subr.bf16.mxu0 0
    %119 = vmatpush1.bf16.msra.mxu0 0
    %120 = vmatprep.subr.bf16.mxu0 0
    %121 = vmatpush1.bf16.msra.mxu0 0
    %122 = vmatprep.subr.bf16.mxu0 0
    %123 = vmatpush1.bf16.msra.mxu0 %v103
    %124 = vmatprep.subr.bf16.mxu0 0
    %125 = vmatpush1.bf16.msra.mxu0 %v102
    %126 = vmatprep.subr.bf16.mxu0 0
    %127 = vmatpush2.bf16.msra.mxu0 0
    %128 = vmatprep.subr.bf16.mxu0 0
    %129 = vmatpush2.bf16.msra.mxu0 0
    %130 = vmatprep.subr.bf16.mxu0 0
    %131 = vmatpush2.bf16.msra.mxu0 0
    %132 = vmatprep.subr.bf16.mxu0 0
    %133 = vmatpush2.bf16.msra.mxu0 0
    %134 = vmatprep.subr.bf16.mxu0 0
    %135 = vmatpush2.bf16.msra.mxu0 0
    %136 = vmatprep.subr.bf16.mxu0 0
    %137 = vmatpush2.bf16.msra.mxu0 0
    %138 = vmatprep.subr.bf16.mxu0 0
    %139 = vmatpush2.bf16.msra.mxu0 0
    %140 = vmatprep.subr.bf16.mxu0 0
    %141 = vmatpush2.bf16.msra.mxu0 0
    %142 = vmatprep.mubr.bf16.mxu0 0
    %143 = vmatmul.mubr.bf16.gmra.mxu0 %v108
    %v144 = vpop.f32.mrf.mxu0
    %v145 = vadd.f32 %v92, %v144
    %v146 = vpop.f32.mrf.mxu0
    %v147 = vpop.f32.mrf.mxu0
    %v148 = vpop.f32.mrf.mxu0
    %149 = vdwg.mxu0
    %v150 = vmax.f32 %v145, 0.0
    %151 = vst [vmem:[#allocation2] sm:$0xff] %v150
    %v152 = vld [vmem:[#allocation2] sm:$0xff]
    %v153 = vpack.c.bf16 %v152, %v152
    %v154 = vld [vmem:[#allocation8] sm:$0xf]
    %v155 = vld [vmem:[#allocation8 + $0x4] sm:$0xf]
    %v156 = vld [vmem:[#allocation8 + $0x8] sm:$0xf]
    %v157 = vld [vmem:[#allocation8 + $0xc] sm:$0xf]
    %v158 = vld [vmem:[#allocation8 + $0x10] sm:$0xf]
    %v159 = vld [vmem:[#allocation8 + $0x14] sm:$0xf]
    %v160 = vld [vmem:[#allocation8 + $0x18] sm:$0xf]
    %v161 = vld [vmem:[#allocation8 + $0x1c] sm:$0xf]
    %v162 = vld [vmem:[#allocation8 + $0x20] sm:$0xf]
    %v163 = vld [vmem:[#allocation8 + $0x24] sm:$0xf]
    %v164 = vld [vmem:[#allocation8 + $0x28] sm:$0xf]
    %v165 = vld [vmem:[#allocation8 + $0x2c] sm:$0xf]
    %v166 = vld [vmem:[#allocation8 + $0x30] sm:$0xf]
    %v167 = vld [vmem:[#allocation8 + $0x34] sm:$0xf]
    %v168 = vld [vmem:[#allocation8 + $0x38] sm:$0xf]
    %v169 = vld [vmem:[#allocation8 + $0x3c] sm:$0xf]
    %v170 = vld [vmem:[%s5] sm:$0x1]
    %v172 = vlaneseq
    %v173 = vshrl.u32 %v172, 7
    %v174 = vsub.s32 0, %v173
    %v175 = vrot.slane %v170, %v174
    %v193 = vunpack.c.l.b16 %v154
    %v194 = vunpack.c.l.b16 %v155
    %v195 = vunpack.c.l.b16 %v156
    %v196 = vunpack.c.l.b16 %v157
    %v197 = vunpack.c.l.b16 %v158
    %v198 = vunpack.c.l.b16 %v159
    %v199 = vunpack.c.l.b16 %v160
    %v200 = vunpack.c.l.b16 %v161
    %v201 = vunpack.c.l.b16 %v162
    %v202 = vunpack.c.l.b16 %v163
    %v203 = vunpack.c.l.b16 %v164
    %v204 = vunpack.c.l.b16 %v165
    %v205 = vunpack.c.l.b16 %v166
    %v206 = vunpack.c.l.b16 %v167
    %v207 = vunpack.c.l.b16 %v168
    %v208 = vunpack.c.l.b16 %v169
    %v209 = vpack.c.b16 %v194, %v193
    %v210 = vpack.c.b16 %v196, %v195
    %v211 = vpack.c.b16 %v198, %v197
    %v212 = vpack.c.b16 %v200, %v199
    %v213 = vpack.c.b16 %v202, %v201
    %v214 = vpack.c.b16 %v204, %v203
    %v215 = vpack.c.b16 %v206, %v205
    %v216 = vpack.c.b16 %v208, %v207
    %225 = vmatprep.subr.bf16.mxu0 0
    %226 = vmatpush1.bf16.msra.mxu0 %v216
    %227 = vmatprep.subr.bf16.mxu0 0
    %228 = vmatpush1.bf16.msra.mxu0 %v215
    %229 = vmatprep.subr.bf16.mxu0 0
    %230 = vmatpush1.bf16.msra.mxu0 %v214
    %231 = vmatprep.subr.bf16.mxu0 0
    %232 = vmatpush1.bf16.msra.mxu0 %v213
    %233 = vmatprep.subr.bf16.mxu0 0
    %234 = vmatpush1.bf16.msra.mxu0 %v212
    %235 = vmatprep.subr.bf16.mxu0 0
    %236 = vmatpush1.bf16.msra.mxu0 %v211
    %237 = vmatprep.subr.bf16.mxu0 0
    %238 = vmatpush1.bf16.msra.mxu0 %v210
    %239 = vmatprep.subr.bf16.mxu0 0
    %240 = vmatpush1.bf16.msra.mxu0 %v209
    %241 = vmatprep.subr.bf16.mxu0 0
    %242 = vmatpush2.bf16.msra.mxu0 0
    %243 = vmatprep.subr.bf16.mxu0 0
    %244 = vmatpush2.bf16.msra.mxu0 0
    %245 = vmatprep.subr.bf16.mxu0 0
    %246 = vmatpush2.bf16.msra.mxu0 0
    %247 = vmatprep.subr.bf16.mxu0 0
    %248 = vmatpush2.bf16.msra.mxu0 0
    %249 = vmatprep.subr.bf16.mxu0 0
    %250 = vmatpush2.bf16.msra.mxu0 0
    %251 = vmatprep.subr.bf16.mxu0 0
    %252 = vmatpush2.bf16.msra.mxu0 0
    %253 = vmatprep.subr.bf16.mxu0 0
    %254 = vmatpush2.bf16.msra.mxu0 0
    %255 = vmatprep.subr.bf16.mxu0 0
    %256 = vmatpush2.bf16.msra.mxu0 0
    %257 = vmatprep.mubr.bf16.mxu0 0
    %258 = vmatmul.mubr.bf16.gmra.mxu0 %v153
    %v259 = vpop.f32.mrf.mxu0
    %v260 = vadd.f32 %v175, %v259
    %v261 = vpop.f32.mrf.mxu0
    %v262 = vpop.f32.mrf.mxu0
    %v263 = vpop.f32.mrf.mxu0
    %264 = vdwg.mxu0
    %v265 = vtanh.pop %v260
    %266 = vst [vmem:[#allocation2] sm:$0xff] %v265
    %v267 = vld [vmem:[#allocation2] sm:$0xff]
    %v268 = vpack.c.bf16 %v267, %v267
    %v269 = vld [vmem:[#allocation9] sm:$0xf]
    %v270 = vld [vmem:[#allocation9 + $0x4] sm:$0xf]
    %v271 = vld [vmem:[#allocation9 + $0x8] sm:$0xf]
    %v272 = vld [vmem:[#allocation9 + $0xc] sm:$0xf]
    %v273 = vld [vmem:[#allocation9 + $0x10] sm:$0xf]
    %v274 = vld [vmem:[#allocation9 + $0x14] sm:$0xf]
    %v275 = vld [vmem:[#allocation9 + $0x18] sm:$0xf]
    %v276 = vld [vmem:[#allocation9 + $0x1c] sm:$0xf]
    %v277 = vld [vmem:[#allocation9 + $0x20] sm:$0xf]
    %v278 = vld [vmem:[#allocation9 + $0x24] sm:$0xf]
    %v279 = vld [vmem:[#allocation9 + $0x28] sm:$0xf]
    %v280 = vld [vmem:[#allocation9 + $0x2c] sm:$0xf]
    %v281 = vld [vmem:[#allocation9 + $0x30] sm:$0xf]
    %v282 = vld [vmem:[#allocation9 + $0x34] sm:$0xf]
    %v283 = vld [vmem:[#allocation9 + $0x38] sm:$0xf]
    %v284 = vld [vmem:[#allocation9 + $0x3c] sm:$0xf]
    %v285 = vld [vmem:[%s6] sm:$0x1]
    %v287 = vlaneseq
    %v288 = vshrl.u32 %v287, 7
    %v289 = vsub.s32 0, %v288
    %v290 = vrot.slane %v285, %v289
    %v308 = vunpack.c.l.b16 %v269
    %v309 = vunpack.c.l.b16 %v270
    %v310 = vunpack.c.l.b16 %v271
    %v311 = vunpack.c.l.b16 %v272
    %v312 = vunpack.c.l.b16 %v273
    %v313 = vunpack.c.l.b16 %v274
    %v314 = vunpack.c.l.b16 %v275
    %v315 = vunpack.c.l.b16 %v276
    %v316 = vunpack.c.l.b16 %v277
    %v317 = vunpack.c.l.b16 %v278
    %v318 = vunpack.c.l.b16 %v279
    %v319 = vunpack.c.l.b16 %v280
    %v320 = vunpack.c.l.b16 %v281
    %v321 = vunpack.c.l.b16 %v282
    %v322 = vunpack.c.l.b16 %v283
    %v323 = vunpack.c.l.b16 %v284
    %v324 = vpack.c.b16 %v309, %v308
    %v325 = vpack.c.b16 %v311, %v310
    %v326 = vpack.c.b16 %v313, %v312
    %v327 = vpack.c.b16 %v315, %v314
    %v328 = vpack.c.b16 %v317, %v316
    %v329 = vpack.c.b16 %v319, %v318
    %v330 = vpack.c.b16 %v321, %v320
    %v331 = vpack.c.b16 %v323, %v322
    %340 = vmatprep.subr.bf16.mxu0 0
    %341 = vmatpush1.bf16.msra.mxu0 %v331
    %342 = vmatprep.subr.bf16.mxu0 0
    %343 = vmatpush1.bf16.msra.mxu0 %v330
    %344 = vmatprep.subr.bf16.mxu0 0
    %345 = vmatpush1.bf16.msra.mxu0 %v329
    %346 = vmatprep.subr.bf16.mxu0 0
    %347 = vmatpush1.bf16.msra.mxu0 %v328
    %348 = vmatprep.subr.bf16.mxu0 0
    %349 = vmatpush1.bf16.msra.mxu0 %v327
    %350 = vmatprep.subr.bf16.mxu0 0
    %351 = vmatpush1.bf16.msra.mxu0 %v326
    %352 = vmatprep.subr.bf16.mxu0 0
    %353 = vmatpush1.bf16.msra.mxu0 %v325
    %354 = vmatprep.subr.bf16.mxu0 0
    %355 = vmatpush1.bf16.msra.mxu0 %v324
    %356 = vmatprep.subr.bf16.mxu0 0
    %357 = vmatpush2.bf16.msra.mxu0 0
    %358 = vmatprep.subr.bf16.mxu0 0
    %359 = vmatpush2.bf16.msra.mxu0 0
    %360 = vmatprep.subr.bf16.mxu0 0
    %361 = vmatpush2.bf16.msra.mxu0 0
    %362 = vmatprep.subr.bf16.mxu0 0
    %363 = vmatpush2.bf16.msra.mxu0 0
    %364 = vmatprep.subr.bf16.mxu0 0
    %365 = vmatpush2.bf16.msra.mxu0 0
    %366 = vmatprep.subr.bf16.mxu0 0
    %367 = vmatpush2.bf16.msra.mxu0 0
    %368 = vmatprep.subr.bf16.mxu0 0
    %369 = vmatpush2.bf16.msra.mxu0 0
    %370 = vmatprep.subr.bf16.mxu0 0
    %371 = vmatpush2.bf16.msra.mxu0 0
    %372 = vmatprep.mubr.bf16.mxu0 0
    %373 = vmatmul.mubr.bf16.gmra.mxu0 %v268
    %v374 = vpop.f32.mrf.mxu0
    %v375 = vadd.f32 %v290, %v374
    %v376 = vpop.f32.mrf.mxu0
    %v377 = vpop.f32.mrf.mxu0
    %v378 = vpop.f32.mrf.mxu0
    %379 = vdwg.mxu0
    %380 = vst [vmem:[#allocation11] sm:$0xff] %v375
    // Predicated region
    $region46: #{tpu_custom_call.1} parent=1 // pred_check
      _
    $region47: #{tpu_custom_call.1} parent=1 // pred_check_branch
      %382 = sbr.rel (0) target = $region49
    $region48: #{tpu_custom_call.1} parent=1 // pred_region
      %s384 = ssub.s32 128, 128
      %385 = vsyncadd [#allocation5], %s384
      %s387 = sshll.u32 [#allocation11], 4
      %s388 = int_to_ptr.vmem [resolvable:$true] %s387
      %390 = dma.vmem_to_hbm [thread:$0]  %s388, 128, %s7, [#allocation5]
    $region49: #{tpu_custom_call.1} parent=1 // pred_fallthru
      _
    // Predicated region
    $region50: #{tpu_custom_call.1} parent=1 // pred_check
      _
    $region51: #{tpu_custom_call.1} parent=1 // pred_check_branch
      %392 = sbr.rel (0) target = $region53
    $region52: #{tpu_custom_call.1} parent=1 // pred_region
      %393 = dma.done [#allocation5], 128
    $region53: #{tpu_custom_call.1} parent=1 // pred_fallthru
      _
    %394 = vsyncpa [#allocation4], 1
    %395 = vsyncpa [#allocation7], 1
    %396 = vsyncpa [#allocation10], 1
    %397 = vsyncpa [#allocation5], 1

</llo_original>
